<compile_context>
chip_gen: v5e
topology: v5e:2x2
jax: 0.10.0
libtpu: 0.0.40
codegen_flags: <defaults>
</compile_context>

<pallas_src>
import jax
import jax.numpy as jnp
from jax.experimental import pallas as pl
from jax.experimental.pallas import tpu as pltpu


def _obj_input_kernel(x_ref, w_ref, b_ref, o_ref):
    # x_ref: (nobj, TS, nfeat)  block of x[b] in native HBM layout
    # w_ref: (nfeat, latent)    == W^T / nobj  (object-mean folded in)
    # b_ref: (1, latent)        f32 bias
    # o_ref: (TS, latent)       lane-dense column slab of the flattened
    #                           (seqlen, bs*latent) output
    # VPU pre-reduction over objects in f32 (cheap: tiles are only nfeat wide),
    # then a single MXU matmul accumulated in f32.
    xs = jnp.sum(x_ref[...].astype(jnp.float32), axis=0)              # (TS, nfeat)
    acc = jnp.dot(xs, w_ref[...], preferred_element_type=jnp.float32)  # (TS, latent)
    o_ref[...] = (acc + b_ref[...]).astype(o_ref.dtype)


def object_input_process(x, weight, bias, *, seq_tile=2048, cast_to_bf16=False):
    """
    x:      (bs, nobj, seqlen, nfeat)
    weight: (latent_dim, nfeat)   -- PyTorch nn.Linear weight layout
    bias:   (latent_dim,)
    returns (seqlen, bs, latent_dim)
    """
    bs, nobj, seqlen, nfeat = x.shape
    latent_dim = weight.shape[0]
    out_dtype = x.dtype

    # Fold the object-mean into the grid-resident weight; scale/cast once here
    # instead of per grid step inside the kernel.
    w_scaled = jnp.transpose(weight) / nobj                            # (nfeat, latent)
    b2 = bias.reshape(1, latent_dim).astype(jnp.float32)

    if cast_to_bf16:
        # v6e/v7x: halves the dominant HBM read traffic; reduction stays f32
        # inside the kernel (upcast before the nobj pre-sum).
        x = x.astype(jnp.bfloat16)
        w_scaled = w_scaled.astype(jnp.bfloat16)
    else:
        w_scaled = w_scaled.astype(jnp.float32)

    # Sequence tile: multiple of 8, large enough to amortize per-step overhead,
    # small enough that x double-buffer (+ lane padding of nfeat) plus the
    # output double-buffer stay well under scoped VMEM on every generation
    # (including v7x's 64 MiB physical VMEM per TensorCore).
    ts = min(seqlen, seq_tile)
    ts = max(8, (ts // 8) * 8)
    # Keep at least ~4 grid steps so v7x's two TensorCores both get pipelined
    # work; shrink the tile rather than running one giant tile per core.
    while bs * (-(-seqlen // ts)) < 4 and ts > 8:
        ts = max(8, ((ts // 2) // 8) * 8)

    grid = (bs, pl.cdiv(seqlen, ts))

    # Output emitted directly in (seqlen, bs, latent), flattened to
    # (seqlen, bs*latent) so every kernel write is an unmasked, lane-dense
    # 128-wide slab; the wrapper reshape below is a free minor-dim split.
    out_flat_shape = (seqlen, bs * latent_dim)

    x_bytes = x.size * x.dtype.itemsize
    out_bytes = seqlen * bs * latent_dim * jnp.dtype(out_dtype).itemsize
    wb_bytes = w_scaled.size * w_scaled.dtype.itemsize + b2.size * b2.dtype.itemsize
    cost = pl.CostEstimate(
        flops=2 * bs * nobj * seqlen * nfeat * latent_dim,
        transcendentals=0,
        bytes_accessed=x_bytes + out_bytes + wb_bytes,
    )

    out_flat = pl.pallas_call(
        _obj_input_kernel,
        out_shape=jax.ShapeDtypeStruct(out_flat_shape, out_dtype),
        grid_spec=pltpu.PrefetchScalarGridSpec(
            num_scalar_prefetch=0,
            grid=grid,
            in_specs=[
                # x consumed in its native HBM layout: no input transpose.
                pl.BlockSpec((None, nobj, ts, nfeat), lambda b, s: (b, 0, s, 0)),
                pl.BlockSpec((nfeat, latent_dim), lambda b, s: (0, 0)),
                pl.BlockSpec((1, latent_dim), lambda b, s: (0, 0)),
            ],
            out_specs=pl.BlockSpec((ts, latent_dim), lambda b, s: (s, b)),
        ),
        compiler_params=pltpu.CompilerParams(
            dimension_semantics=("parallel", "parallel"),
            vmem_limit_bytes=32 << 20,
        ),
        cost_estimate=cost,
    )(x, w_scaled, b2)

    # Contiguous split of the minor dim: layout-preserving, no HBM transpose.
    # TODO(synk): if upstream can pack the feature axis as (bs, seqlen, nobj*nfeat),
    # switch to a stacked (nobj*nfeat, latent) weight for a dense-K matmul and
    # 4x less lane padding of the x tile.
    return out_flat.reshape(seqlen, bs, latent_dim)


def _reference(x, weight, bias):
    # Pure-JAX reproduction of the PyTorch forward (linear per object, then mean).
    xp = jnp.transpose(x, (0, 2, 1, 3))                        # (bs, seqlen, nobj, nfeat)
    y = jnp.einsum("bsof,df->bsod", xp, weight) + bias         # Linear
    y = jnp.mean(y, axis=2)                                    # mean over nobj
    return jnp.transpose(y, (1, 0, 2))                         # (seqlen, bs, latent_dim)


if __name__ == "__main__":
    # Small shapes consistent with the module's forward pass.
    bs, nobj, seqlen = 2, 4, 16
    input_feats, latent_dim = 32, 128   # latent multiple of 128 -> lane-dense output

    key = jax.random.PRNGKey(0)
    kx, kw, kb = jax.random.split(key, 3)

    x = jax.random.normal(kx, (bs, nobj, seqlen, input_feats), dtype=jnp.float32)

    # Deterministic nn.Linear-style init: U(-1/sqrt(in), 1/sqrt(in))
    bound = 1.0 / (input_feats ** 0.5)
    weight = jax.random.uniform(kw, (latent_dim, input_feats),
                                minval=-bound, maxval=bound, dtype=jnp.float32)
    bias = jax.random.uniform(kb, (latent_dim,),
                              minval=-bound, maxval=bound, dtype=jnp.float32)

    out = jax.block_until_ready(object_input_process(x, weight, bias))
    ref = _reference(x, weight, bias)

    assert out.shape == (seqlen, bs, latent_dim), out.shape
    assert jnp.allclose(out, ref, atol=1e-5, rtol=1e-5), float(jnp.max(jnp.abs(out - ref)))

    print("KERNEL_OK")
</pallas_src>

<mosaic_0001>
module attributes {stable_mosaic.version = 11 : i64} {
  func.func @_obj_input_kernel(%arg0: i32, %arg1: i32, %arg2: memref<1x4x8x32xf32, #tpu.memory_space<vmem>>, %arg3: memref<32x128xf32, #tpu.memory_space<vmem>>, %arg4: memref<1x128xf32, #tpu.memory_space<vmem>>, %arg5: memref<8x128xf32, #tpu.memory_space<vmem>>) attributes {dimension_semantics = [#tpu.dimension_semantics<parallel>, #tpu.dimension_semantics<parallel>], iteration_bounds = array<i64: 2, 2>, scalar_prefetch = 0 : i64, scratch_operands = 0 : i64, tpu.core_type = #tpu.core_type<tc>, window_params = [{transform_indices = @transform_0, window_bounds = array<i64: 1, 4, 8, 32>}, {pipeline_mode = #tpu.pipeline_mode<synchronous>, transform_indices = @transform_1, window_bounds = array<i64: 32, 128>}, {pipeline_mode = #tpu.pipeline_mode<synchronous>, transform_indices = @transform_2, window_bounds = array<i64: 1, 128>}, {transform_indices = @transform_3, window_bounds = array<i64: 8, 128>}]} {
    %c0 = arith.constant 0 : index
    %c0_0 = arith.constant 0 : index
    %c0_1 = arith.constant 0 : index
    %c0_2 = arith.constant 0 : index
    %0 = vector.load %arg2[%c0, %c0_0, %c0_1, %c0_2] : memref<1x4x8x32xf32, #tpu.memory_space<vmem>>, vector<1x4x8x32xf32>
    %1 = vector.shape_cast %0 : vector<1x4x8x32xf32> to vector<4x8x32xf32>
    %cst = arith.constant dense<0.000000e+00> : vector<8x32xf32>
    %2 = vector.multi_reduction <add>, %1, %cst [0] : vector<4x8x32xf32> to vector<8x32xf32>
    %c0_3 = arith.constant 0 : index
    %c0_4 = arith.constant 0 : index
    %3 = vector.load %arg3[%c0_3, %c0_4] : memref<32x128xf32, #tpu.memory_space<vmem>>, vector<32x128xf32>
    %cst_5 = arith.constant dense<0.000000e+00> : vector<8x128xf32>
    %4 = tpu.matmul %2, %3, %cst_5 {dimension_numbers = #tpu.dot_dimension_numbers<[1], [0], [0], [1], [0, 0, 1, 1], [], []>} : vector<8x32xf32>, vector<32x128xf32>, vector<8x128xf32> -> vector<8x128xf32>
    %c0_6 = arith.constant 0 : index
    %c0_7 = arith.constant 0 : index
    %5 = vector.load %arg4[%c0_6, %c0_7] : memref<1x128xf32, #tpu.memory_space<vmem>>, vector<1x128xf32>
    %6 = vector.broadcast %5 : vector<1x128xf32> to vector<8x128xf32>
    %7 = arith.addf %4, %6 : vector<8x128xf32>
    %c0_8 = arith.constant 0 : index
    %c0_9 = arith.constant 0 : index
    %8 = vector.load %arg5[%c0_8, %c0_9] : memref<8x128xf32, #tpu.memory_space<vmem>>, vector<8x128xf32>
    tpu.vector_store %arg5[%c0_8, %c0_9], %7 {strides = array<i32>} : memref<8x128xf32, #tpu.memory_space<vmem>>, vector<8x128xf32>,
    return
  }
  func.func @transform_0(%arg0: i32, %arg1: i32) -> (i32, i32, i32, i32) {
    %c0_i32 = arith.constant 0 : i32
    %c0_i32_0 = arith.constant 0 : i32
    %c0_i32_1 = arith.constant 0 : i32
    return %arg0, %c0_i32, %arg1, %c0_i32_0 : i32, i32, i32, i32
  }
  func.func @transform_1(%arg0: i32, %arg1: i32) -> (i32, i32) {
    %c0_i32 = arith.constant 0 : i32
    %c0_i32_0 = arith.constant 0 : i32
    %c0_i32_1 = arith.constant 0 : i32
    return %c0_i32, %c0_i32_0 : i32, i32
  }
  func.func @transform_2(%arg0: i32, %arg1: i32) -> (i32, i32) {
    %c0_i32 = arith.constant 0 : i32
    %c0_i32_0 = arith.constant 0 : i32
    %c0_i32_1 = arith.constant 0 : i32
    return %c0_i32, %c0_i32_0 : i32, i32
  }
  func.func @transform_3(%arg0: i32, %arg1: i32) -> (i32, i32) {
    %c0_i32 = arith.constant 0 : i32
    return %arg1, %arg0 : i32, i32
  }
}

</mosaic_0001>

<llo_original>
// kernel: tpu_custom_call.1
$region0: #{tpu_custom_call.1}
  #allocation0 [shape = 'u32[]', space=smem, size = 0x4, offset = 0x4, fixed_abs, tag = 'smem constant byte address 0x4 - core index']
  #allocation1 [shape = 'u32[72,128]{1,0:T(1,128)}', space=vmem, size = 0x9000, scoped, tag = 'internal scratch']
  %s0 = inlined_call_operand.hbm [shape: f32[2,4,16,32], index: 0, kind: input, shape index: {}]
  %s1 = inlined_call_operand.hbm [shape: f32[32,128], index: 1, kind: input, shape index: {}]
  %s2 = inlined_call_operand.vmem [shape: f32[1,128], index: 2, kind: input, shape index: {}]
  %s3 = inlined_call_operand.hbm [shape: f32[16,256], index: 3, kind: output, shape index: {}]
  %s4 = sld [smem:[#allocation0]]
  $region53: #{tpu_custom_call.1} parent=0
    _
  %s6 = ssub.s32 1, %s4
  %s7 = scalar_select 0, %s6, %s4
  $region1: #{tpu_custom_call.1} parent=0
    #allocation2 [shape = 'u8[32768]{0}', space=vmem, size = 0x8000, scoped, tag = 'input window, operand 0']
    #allocation3 [shape = 's32[2]{0}', space=sflag, size = 0x8, scoped, tag = 'scoped memory for tpu_custom_call.1']
    #allocation4 [shape = 's32[2]{0}', space=sflag, size = 0x8, scoped, tag = 'scoped memory for tpu_custom_call.1']
    #allocation5 [shape = 'u8[16384]{0}', space=vmem, size = 0x4000, scoped, tag = 'input window, operand 1, single buffered']
    #allocation6 [shape = 's32[1]{0}', space=sflag, size = 0x4, scoped, tag = 'scoped memory for tpu_custom_call.1']
    #allocation7 [shape = 'u8[8192]{0}', space=vmem, size = 0x2000, scoped, tag = 'output window, operand 0']
    %8 = vsyncpa [#allocation3], 0
    %s9 = scalar_lea.sflag [#allocation3], 1
    %10 = vsyncpa %s9, 0
    %11 = vsyncpa [#allocation6], 0
    %12 = vsyncpa [#allocation4], 0
    %s13 = scalar_lea.sflag [#allocation4], 1
    %14 = vsyncpa %s13, 0
    loop: start=0, step=1, limit=6
    $region2: #{tpu_custom_call.1} parent=1 // loop_pre_header
      _
    $region3: #{tpu_custom_call.1} parent=1 // loop_header
      %s16 = sphi 0, %s20
      %p17 = scmp.ge.s32.totalorder %s16, 6
      %s23 = sphi 0, %s35
      %s24 = sphi 0, %s31
      %s25 = sphi 0, %s23
      %s26 = sphi 0, %s24
      %s27 = sphi 0, %s25
      %s28 = sphi 0, %s26
      %s40 = sphi 0, %s42
      %s43 = sphi 0, %s40
      %s44 = sphi 0, %s43
      %s60 = sphi 0, %s44
      %s64 = sphi 0, %s64
      %s66 = sphi 0, %s64
      %s67 = sphi 0, %s66
      %s81 = sphi 0, %s67
      %s85 = sphi 0, %s85
      %s87 = sphi 0, %s85
      %s88 = sphi 0, %s87
      %s102 = sphi 0, %s88
      %s110 = sphi 0, %s112
      %s113 = sphi 0, %s110
      %s114 = sphi 0, %s113
      %s130 = sphi 0, %s114
    $region4: #{tpu_custom_call.1} parent=1 // loop_header_branch
      %19 = sbr.rel (%p17) target = $region8
    $region5: #{tpu_custom_call.1} parent=1 // loop_body
      %s21 = ssub.s32 %s16, 1
      %s22 = ssub.s32 %s16, 2
      %s29 = sadd.s32 1, %s24
      %p30 = scmp.ge.s32.totalorder %s29, 2
      %s31 = scalar_select %p30, 0, %s29
      %s32 = sadd.s32 1, %s23
      %s33 = scalar_select %p30, %s32, %s23
      %p34 = scmp.ge.s32.totalorder %s33, 2
      %s35 = scalar_select %p34, 0, %s33
      %s36 = ssub.s32 %s23, %s35
      %s37 = ssub.s32 %s24, %s31
      %s38 = sor.u32 %s36, %s37
      %p39 = scmp.eq.s32.totalorder %s38, 0
      %s41 = sadd.s32 %s40, 1
      %s42 = scalar_select %p39, %s40, %s41
      %p45 = pneg %p39
      %p46 = scmp.eq.s32.totalorder %s16, 3
      %p47 = por %p45, %p46
      %p48 = scmp.ne.s32.totalorder %s40, %s43
      %p49 = scmp.eq.s32.totalorder %s16, 0
      %p50 = por %p48, %p49
      %p51 = scmp.ne.s32.totalorder %s40, %s43
      %p52 = scmp.eq.s32.totalorder %s21, 3
      %p53 = por %p51, %p52
      %p54 = scmp.ne.s32.totalorder %s43, %s44
      %p55 = scmp.eq.s32.totalorder %s21, 0
      %p56 = por %p54, %p55
      %p57 = scmp.ne.s32.totalorder %s43, %s44
      %p58 = scmp.eq.s32.totalorder %s22, 3
      %p59 = por %p57, %p58
      %p61 = scmp.ne.s32.totalorder %s44, %s60
      %p62 = scmp.eq.s32.totalorder %s22, 0
      %p63 = por %p61, %p62
      %s65 = sadd.s32 %s64, 1
      %p68 = scmp.eq.s32.totalorder %s16, 3
      %p69 = scmp.ne.s32.totalorder %s64, %s66
      %p70 = scmp.eq.s32.totalorder %s16, 0
      %p71 = por %p69, %p70
      %p72 = scmp.ne.s32.totalorder %s64, %s66
      %p73 = scmp.eq.s32.totalorder %s21, 3
      %p74 = por %p72, %p73
      %p75 = scmp.ne.s32.totalorder %s66, %s67
      %p76 = scmp.eq.s32.totalorder %s21, 0
      %p77 = por %p75, %p76
      %p78 = scmp.ne.s32.totalorder %s66, %s67
      %p79 = scmp.eq.s32.totalorder %s22, 3
      %p80 = por %p78, %p79
      %p82 = scmp.ne.s32.totalorder %s67, %s81
      %p83 = scmp.eq.s32.totalorder %s22, 0
      %p84 = por %p82, %p83
      %s86 = sadd.s32 %s85, 1
      %p89 = scmp.eq.s32.totalorder %s16, 3
      %p90 = scmp.ne.s32.totalorder %s85, %s87
      %p91 = scmp.eq.s32.totalorder %s16, 0
      %p92 = por %p90, %p91
      %p93 = scmp.ne.s32.totalorder %s85, %s87
      %p94 = scmp.eq.s32.totalorder %s21, 3
      %p95 = por %p93, %p94
      %p96 = scmp.ne.s32.totalorder %s87, %s88
      %p97 = scmp.eq.s32.totalorder %s21, 0
      %p98 = por %p96, %p97
      %p99 = scmp.ne.s32.totalorder %s87, %s88
      %p100 = scmp.eq.s32.totalorder %s22, 3
      %p101 = por %p99, %p100
      %p103 = scmp.ne.s32.totalorder %s88, %s102
      %p104 = scmp.eq.s32.totalorder %s22, 0
      %p105 = por %p103, %p104
      %s106 = ssub.s32 %s24, %s31
      %s107 = ssub.s32 %s23, %s35
      %s108 = sor.u32 %s106, %s107
      %p109 = scmp.eq.s32.totalorder %s108, 0
      %s111 = sadd.s32 %s110, 1
      %s112 = scalar_select %p109, %s110, %s111
      %p115 = pneg %p109
      %p116 = scmp.eq.s32.totalorder %s16, 3
      %p117 = por %p115, %p116
      %p118 = scmp.ne.s32.totalorder %s110, %s113
      %p119 = scmp.eq.s32.totalorder %s16, 0
      %p120 = por %p118, %p119
      %p121 = scmp.ne.s32.totalorder %s110, %s113
      %p122 = scmp.eq.s32.totalorder %s21, 3
      %p123 = por %p121, %p122
      %p124 = scmp.ne.s32.totalorder %s113, %s114
      %p125 = scmp.eq.s32.totalorder %s21, 0
      %p126 = por %p124, %p125
      %p127 = scmp.ne.s32.totalorder %s113, %s114
      %p128 = scmp.eq.s32.totalorder %s22, 3
      %p129 = por %p127, %p128
      %p131 = scmp.ne.s32.totalorder %s114, %s130
      %p132 = scmp.eq.s32.totalorder %s22, 0
      %p133 = por %p131, %p132
      %p134 = scmp.le.s32.totalorder 1, %s16
      %p135 = scmp.lt.s32.totalorder %s16, 5
      %p136 = pnand %p134, %p135
      %p137 = pneg %p136
      // Predicated region
      $region9: #{tpu_custom_call.1} parent=5 // pred_check
        _
      $region10: #{tpu_custom_call.1} parent=5 // pred_check_branch
        %139 = sbr.rel (%p136) target = $region12
      $region11: #{tpu_custom_call.1} parent=5 // pred_region
        %s140 = ssub.s32 %s16, 1
        // Predicated region
        $region13: #{tpu_custom_call.1} parent=11 // pred_check
          %p141 = pneg %p77
        $region14: #{tpu_custom_call.1} parent=11 // pred_check_branch
          %143 = sbr.rel (%p141) target = $region16
        $region15: #{tpu_custom_call.1} parent=11 // pred_region
          %145 = vsyncadd [#allocation6], 0
          %s146 = sshll.u32 %s1, 4
          %s147 = int_to_ptr.hbm [resolvable:$true] %s146
          %s148 = sshll.u32 [#allocation5], 4
          %s149 = int_to_ptr.vmem [resolvable:$true] %s148
          %154 = dma.hbm_to_vmem [thread:$0]  %s147, 512, %s149, [#allocation6], 128, 128, 8
        $region16: #{tpu_custom_call.1} parent=11 // pred_fallthru
          _
        // Predicated region
        $region17: #{tpu_custom_call.1} parent=11 // pred_check
          %p155 = pneg %p98
        $region18: #{tpu_custom_call.1} parent=11 // pred_check_branch
          %157 = sbr.rel (%p155) target = $region20
        $region19: #{tpu_custom_call.1} parent=11 // pred_region
          _
        $region20: #{tpu_custom_call.1} parent=11 // pred_fallthru
          _
      $region12: #{tpu_custom_call.1} parent=5 // pred_fallthru
        _
      %p158 = scmp.lt.s32.totalorder %s16, 4
      // Predicated region
      $region21: #{tpu_custom_call.1} parent=5 // pred_check
        %p159 = pneg %p158
      $region22: #{tpu_custom_call.1} parent=5 // pred_check_branch
        %161 = sbr.rel (%p159) target = $region24
      $region23: #{tpu_custom_call.1} parent=5 // pred_region
        // Predicated region
        $region25: #{tpu_custom_call.1} parent=23 // pred_check
          %p162 = pneg %p50
        $region26: #{tpu_custom_call.1} parent=23 // pred_check_branch
          %164 = sbr.rel (%p162) target = $region28
        $region27: #{tpu_custom_call.1} parent=23 // pred_region
          %s165 = sand.u32 %s40, 1
          %s166 = scalar_lea.sflag [#allocation3], %s165
          %s167 = sand.u32 %s40, 1
          %s168 = smul.addr %s167, 32
          %s169 = scalar_lea.vmem [#allocation2], %s168
          %171 = vsyncadd %s166, 0
          %s172 = smul.addr %s23, 8
          %s173 = sadd.s32 %s24, %s172
          %s174 = smul.addr %s173, 8
          %s175 = scalar_lea.hbm %s0, %s174
          %s176 = sshll.u32 %s175, 4
          %s177 = int_to_ptr.hbm [resolvable:$true] %s176
          %s178 = sshll.u32 %s169, 4
          %s179 = int_to_ptr.vmem [resolvable:$true] %s178
          %184 = dma.hbm_to_vmem [thread:$0]  %s177, 512, %s179, %s166, 256, 128, 8
        $region28: #{tpu_custom_call.1} parent=23 // pred_fallthru
          _
      $region24: #{tpu_custom_call.1} parent=5 // pred_fallthru
        _
      %p185 = scmp.le.s32.totalorder 1, %s16
      %p186 = scmp.lt.s32.totalorder %s16, 5
      %p187 = pnand %p185, %p186
      %p188 = pneg %p187
      // Predicated region
      $region29: #{tpu_custom_call.1} parent=5 // pred_check
        _
      $region30: #{tpu_custom_call.1} parent=5 // pred_check_branch
        %190 = sbr.rel (%p187) target = $region32
      $region31: #{tpu_custom_call.1} parent=5 // pred_region
        %s191 = ssub.s32 %s16, 1
        %s192 = sand.u32 %s43, 1
        %s193 = scalar_lea.sflag [#allocation3], %s192
        %s194 = sand.u32 %s43, 1
        %s195 = smul.addr %s194, 32
        %s196 = scalar_lea.vmem [#allocation2], %s195
        // Predicated region
        $region33: #{tpu_custom_call.1} parent=31 // pred_check
          %p197 = pneg %p56
        $region34: #{tpu_custom_call.1} parent=31 // pred_check_branch
          %199 = sbr.rel (%p197) target = $region36
        $region35: #{tpu_custom_call.1} parent=31 // pred_region
          %201 = dma.done %s193, 512
        $region36: #{tpu_custom_call.1} parent=31 // pred_fallthru
          _
        // Predicated region
        $region37: #{tpu_custom_call.1} parent=31 // pred_check
          %p202 = pneg %p77
        $region38: #{tpu_custom_call.1} parent=31 // pred_check_branch
          %204 = sbr.rel (%p202) target = $region40
        $region39: #{tpu_custom_call.1} parent=31 // pred_region
          %206 = dma.done [#allocation6], 512
        $region40: #{tpu_custom_call.1} parent=31 // pred_fallthru
          _
        %s207 = sand.u32 %s43, 1
        %s208 = scalar_lea.sflag [#allocation3], %s207
        %s209 = sand.u32 %s43, 1
        %s210 = smul.addr %s209, 32
        %s211 = scalar_lea.vmem [#allocation2], %s210
        %p212 = pneg %p56
        %p213 = pneg %p53
        %p214 = pneg %p77
        %p215 = pneg %p74
        %p216 = pneg %p98
        %p217 = pneg %p95
        %p218 = pneg %p126
        %p219 = pneg %p123
        %s220 = sand.u32 %s113, 1
        %s221 = scalar_lea.sflag [#allocation4], %s220
        %s222 = sand.u32 %s113, 1
        %s223 = smul.addr %s222, 8
        %s224 = scalar_lea.vmem [#allocation7], %s223
        %v225 = vld [vmem:[%s196] sm:$0xff]
        %v226 = vld [vmem:[%s196 + $0x8] sm:$0xff]
        %v227 = vld [vmem:[%s196 + $0x10] sm:$0xff]
        %v228 = vld [vmem:[%s196 + $0x18] sm:$0xff]
        %vm229 = vcmask 261120
        %v230 = vsel %vm229, %v225, 0.0
        %v231 = vsel %vm229, %v226, 0.0
        %v232 = vadd.f32 %v230, %v231
        %v233 = vsel %vm229, %v227, 0.0
        %v234 = vadd.f32 %v232, %v233
        %v235 = vsel %vm229, %v228, 0.0
        %v236 = vadd.f32 %v234, %v235
        %v237 = vld [vmem:[#allocation5] sm:$0xff]
        %v238 = vld [vmem:[#allocation5 + $0x8] sm:$0xff]
        %v239 = vld [vmem:[#allocation5 + $0x10] sm:$0xff]
        %v240 = vld [vmem:[#allocation5 + $0x18] sm:$0xff]
        %v241 = vld [vmem:[%s2] sm:$0x1]
        %v243 = vperm.slane %v241, 0
        %v246 = vsel %vm229, %v236, 0
        %248 = vmatpush.msra.mxu0 0.0
        %249 = vmatpush.msra.mxu0 0.0
        %250 = vmatpush.msra.mxu0 0.0
        %251 = vmatpush.msra.mxu0 0.0
        %252 = vmatpush.msra.mxu0 0.0
        %253 = vmatpush.msra.mxu0 0.0
        %254 = vmatpush.msra.mxu0 0.0
        %255 = vmatpush.msra.mxu0 0.0
        %256 = vmatpush.msra.mxu0 0.0
        %257 = vmatpush.msra.mxu0 0.0
        %258 = vmatpush.msra.mxu0 0.0
        %259 = vmatpush.msra.mxu0 0.0
        %260 = vmatpush.msra.mxu0 %v240
        %261 = vmatpush.msra.mxu0 %v239
        %262 = vmatpush.msra.mxu0 %v238
        %263 = vmatpush.msra.mxu0 %v237
        %264 = vmatmul.f32.gmra.mxu0 %v246
        %v265 = vpop.f32.mrf.mxu0
        %v266 = vadd.f32 %v243, %v265
        %267 = vdwg.mxu0
        %268 = vst [vmem:[%s224] sm:$0xff] %v266
        %s269 = sand.u32 %s113, 1
        %s270 = scalar_lea.sflag [#allocation4], %s269
        %s271 = sand.u32 %s113, 1
        %s272 = smul.addr %s271, 8
        %s273 = scalar_lea.vmem [#allocation7], %s272
        // Predicated region
        $region41: #{tpu_custom_call.1} parent=31 // pred_check
          %p274 = pneg %p123
        $region42: #{tpu_custom_call.1} parent=31 // pred_check_branch
          %276 = sbr.rel (%p274) target = $region44
        $region43: #{tpu_custom_call.1} parent=31 // pred_region
          %278 = vsyncadd %s270, 0
          %s279 = smul.addr %s26, 2
          %s280 = sadd.s32 %s25, %s279
          %s281 = smul.addr %s280, 8
          %s282 = scalar_lea.hbm %s3, %s281
          %s284 = sshll.u32 %s273, 4
          %s285 = int_to_ptr.vmem [resolvable:$true] %s284
          %s286 = sshll.u32 %s282, 4
          %s287 = int_to_ptr.hbm [resolvable:$true] %s286
          %289 = dma.vmem_to_hbm [thread:$0]  %s285, 128, %s287, %s270
        $region44: #{tpu_custom_call.1} parent=31 // pred_fallthru
          _
      $region32: #{tpu_custom_call.1} parent=5 // pred_fallthru
        _
      %p290 = scmp.le.s32.totalorder 2, %s16
      // Predicated region
      $region45: #{tpu_custom_call.1} parent=5 // pred_check
        %p291 = pneg %p290
      $region46: #{tpu_custom_call.1} parent=5 // pred_check_branch
        %293 = sbr.rel (%p291) target = $region48
      $region47: #{tpu_custom_call.1} parent=5 // pred_region
        %s294 = ssub.s32 %s16, 2
        // Predicated region
        $region49: #{tpu_custom_call.1} parent=47 // pred_check
          %p295 = pneg %p129
        $region50: #{tpu_custom_call.1} parent=47 // pred_check_branch
          %297 = sbr.rel (%p295) target = $region52
        $region51: #{tpu_custom_call.1} parent=47 // pred_region
          %s298 = sand.u32 %s114, 1
          %s299 = scalar_lea.sflag [#allocation4], %s298
          %s300 = sand.u32 %s114, 1
          %s301 = smul.addr %s300, 8
          %s302 = scalar_lea.vmem [#allocation7], %s301
          %304 = dma.done %s299, 128
        $region52: #{tpu_custom_call.1} parent=47 // pred_fallthru
          _
      $region48: #{tpu_custom_call.1} parent=5 // pred_fallthru
        _
    $region6: #{tpu_custom_call.1} parent=1 // loop_footer
      %s20 = sadd.s32 1, %s16
    $region7: #{tpu_custom_call.1} parent=1 // loop_footer_branch
      %15 = sbr.rel target = $region3
    $region8: #{tpu_custom_call.1} parent=1 // loop_exit
      _
    %305 = vsyncpa [#allocation3], 1
    %s306 = scalar_lea.sflag [#allocation3], 1
    %307 = vsyncpa %s306, 1
    %308 = vsyncpa [#allocation6], 1
    %309 = vsyncpa [#allocation4], 1
    %s310 = scalar_lea.sflag [#allocation4], 1
    %311 = vsyncpa %s310, 1

</llo_original>
